<compile_context>
chip_gen: v7x
topology: tpu7x:2x2x1
jax: 0.10.0
libtpu: 0.0.40
codegen_flags: <defaults>
</compile_context>

<pallas_src>
import jax
import jax.numpy as jnp
from jax.experimental import pallas as pl
from jax.experimental.pallas import tpu as pltpu

D_PAD = 128     # input_dim (60)  padded to one lane width
H_PAD = 128     # hidden_dim (120) padded
F_PAD = 128     # fc1 out (input_dim // 2 = 30) padded
W2_ROWS = 8     # w2 stored as an (8, F_PAD) block; only row 0 is real (sublane-aligned MXU lhs)
N_GATES = 3     # i, g, o  (f-gate dropped because c0 == 0)


def _sigmoid_approx(x):
    # exp + approximate reciprocal both run on the EUP slot; clip keeps exp finite
    # (sigmoid saturates in f32 well before |x|=30, so the clip is numerically exact).
    return pl.reciprocal(1.0 + jnp.exp(-jnp.clip(x, -30.0, 30.0)), approx=True)


def _sigmoid_exact(x):
    # Exact division for the final probability output (cheap: it runs on (1, block_b) only).
    return 1.0 / (1.0 + jnp.exp(-jnp.clip(x, -30.0, 30.0)))


def is_good_track_kernel(x_ref, wih_ref, b_ref, w1_ref, b1_ref, w2_ref, b2_ref, out_ref):
    # One fused gate matmul: (TB, D_PAD) @ (D_PAD, 3*H_PAD), bf16 operands, f32 accumulation.
    gates = jnp.dot(x_ref[...], wih_ref[...], preferred_element_type=jnp.float32) + b_ref[...]

    i_g = _sigmoid_approx(gates[:, 0 * H_PAD:1 * H_PAD])
    g_g = jnp.tanh(gates[:, 1 * H_PAD:2 * H_PAD])
    o_g = _sigmoid_approx(gates[:, 2 * H_PAD:3 * H_PAD])

    # h0 == c0 == 0  =>  c1 = i*g, forget gate contributes nothing.
    h1 = o_g * jnp.tanh(i_g * g_g)

    # fc1 -> sigmoid (lane-dense padded shapes).
    z1 = _sigmoid_approx(jnp.dot(h1.astype(jnp.bfloat16), w1_ref[...],
                                 preferred_element_type=jnp.float32) + b1_ref[...])

    # fc2: w2 has one real column.  Contract it (stored as padded (8, F_PAD) rows) against
    # z1 along the feature axis -> (8, TB); row 0 is the real logit row, already lane-dense.
    logits8 = jax.lax.dot_general(
        w2_ref[...], z1.astype(jnp.bfloat16),
        dimension_numbers=(((1,), (1,)), ((), ())),
        preferred_element_type=jnp.float32)
    logits = logits8[0:1, :] + b2_ref[0, 0]          # (1, TB), lane-dense
    out_ref[...] = _sigmoid_exact(logits)


def is_good_track_forward(x, packed, *, block_b=None):
    """x: (B, input_dim) f32.  Returns (B, 1) f32 probabilities."""
    B, D = x.shape
    if block_b is None:
        # Single block for small batches; 512-row blocks for large ones.
        block_b = min(512, ((B + 127) // 128) * 128)
    assert block_b % 128 == 0
    nb = pl.cdiv(B, block_b)
    b_pad = nb * block_b

    # Pre-pad AND pre-cast x to bf16 (halves the x DMA; kernel feeds the MXU bf16 anyway).
    x_p = jnp.zeros((b_pad, D_PAD), jnp.bfloat16).at[:B, :D].set(x.astype(jnp.bfloat16))

    wih, b, w1, b1, w2, b2 = (packed[k] for k in ("wih", "b", "w1", "b1", "w2", "b2"))

    def resident(arr):  # whole array, resident across the batch grid (constant index_map)
        return pl.BlockSpec(arr.shape, lambda i: (0, 0))

    out = pl.pallas_call(
        is_good_track_kernel,
        out_shape=jax.ShapeDtypeStruct((1, b_pad), jnp.float32),
        grid=(nb,),
        in_specs=[
            pl.BlockSpec((block_b, D_PAD), lambda i: (i, 0)),
            resident(wih), resident(b),
            resident(w1), resident(b1),
            resident(w2),
            pl.BlockSpec(memory_space=pltpu.MemorySpace.SMEM),   # b2 scalar
        ],
        out_specs=pl.BlockSpec((1, block_b), lambda i: (0, i)),
        compiler_params=pltpu.CompilerParams(
            # Only ask for cross-core sharding when there are enough blocks to matter;
            # a 1-2 step latency-bound grid runs on one core.
            dimension_semantics=(("parallel",) if nb >= 8 else ("arbitrary",))),
    )(x_p, wih, b, w1, b1, w2, b2)
    return out[0, :B].reshape(B, 1)


def init_params(key, input_dim, hidden_dim):
    """Raw f32, unpadded parameters matching the PyTorch module's init."""
    ks = jax.random.split(key, 8)
    s = 1.0 / jnp.sqrt(hidden_dim)
    f1 = input_dim // 2
    wih = jax.random.uniform(ks[0], (4, input_dim, hidden_dim), jnp.float32, -s, s)
    whh = jax.random.uniform(ks[1], (4, hidden_dim, hidden_dim), jnp.float32, -s, s)
    b_ih = jax.random.uniform(ks[2], (4, 1, hidden_dim), jnp.float32, -s, s)
    b_hh = jax.random.uniform(ks[3], (4, 1, hidden_dim), jnp.float32, -s, s)
    w1 = jax.random.uniform(ks[4], (hidden_dim, f1), jnp.float32, -s, s)
    b1 = jax.random.uniform(ks[5], (1, f1), jnp.float32, -s, s)
    s2 = 1.0 / jnp.sqrt(f1)
    w2 = jax.random.uniform(ks[6], (f1, 1), jnp.float32, -s2, s2)
    b2 = jax.random.uniform(ks[7], (1, 1), jnp.float32, -s2, s2)
    return dict(wih=wih, whh=whh, b=b_ih + b_hh, w1=w1, b1=b1, w2=w2, b2=b2)


def pack_params(raw):
    """Fuse/pad/cast weights for the kernel: gates (i,g,o) concatenated, dims padded to 128,
    weight matrices in bf16, biases in f32.  w2 is stored as a sublane-padded (8, F_PAD)
    row block (row 0 real) so the fc2 contraction emits the transposed, lane-dense row."""
    D, H = raw["wih"].shape[1], raw["wih"].shape[2]
    F1 = raw["w1"].shape[1]
    gate_ids = (0, 2, 3)  # PyTorch order (i, f, g, o) -> keep i, g, o
    wih_p = jnp.zeros((D_PAD, N_GATES * H_PAD), jnp.float32)
    b_p = jnp.zeros((1, N_GATES * H_PAD), jnp.float32)
    for k, g in enumerate(gate_ids):
        wih_p = wih_p.at[:D, k * H_PAD:k * H_PAD + H].set(raw["wih"][g])
        b_p = b_p.at[:, k * H_PAD:k * H_PAD + H].set(raw["b"][g])
    w1_p = jnp.zeros((H_PAD, F_PAD), jnp.float32).at[:H, :F1].set(raw["w1"])
    b1_p = jnp.zeros((1, F_PAD), jnp.float32).at[:, :F1].set(raw["b1"])
    w2_p = jnp.zeros((W2_ROWS, F_PAD), jnp.float32).at[0, :F1].set(raw["w2"][:, 0])
    b2_s = raw["b2"].reshape(1, 1).astype(jnp.float32)
    return dict(wih=wih_p.astype(jnp.bfloat16), b=b_p,
                w1=w1_p.astype(jnp.bfloat16), b1=b1_p,
                w2=w2_p.astype(jnp.bfloat16), b2=b2_s)


def reference_forward_f32(x, raw):
    """Full-precision reference of the original module math (zero h0/c0, all 4 gates)."""
    h0 = jnp.zeros((x.shape[0], raw["whh"].shape[1]), jnp.float32)
    c0 = jnp.zeros_like(h0)
    gate = lambda g: x @ raw["wih"][g] + h0 @ raw["whh"][g] + raw["b"][g]
    i_g = jax.nn.sigmoid(gate(0))
    f_g = jax.nn.sigmoid(gate(1))
    g_g = jnp.tanh(gate(2))
    o_g = jax.nn.sigmoid(gate(3))
    c1 = f_g * c0 + i_g * g_g
    h1 = o_g * jnp.tanh(c1)
    z1 = jax.nn.sigmoid(h1 @ raw["w1"] + raw["b1"])
    return jax.nn.sigmoid(z1 @ raw["w2"] + raw["b2"])


def reference_forward_bf16(x, packed):
    """Mirrors the kernel numerics (bf16 dot inputs, f32 accumulation, exact sigmoid)."""
    B, D = x.shape
    xb = jnp.zeros((B, D_PAD), jnp.bfloat16).at[:, :D].set(x.astype(jnp.bfloat16))
    gates = jnp.dot(xb, packed["wih"], preferred_element_type=jnp.float32) + packed["b"]
    i_g = jax.nn.sigmoid(gates[:, :H_PAD])
    g_g = jnp.tanh(gates[:, H_PAD:2 * H_PAD])
    o_g = jax.nn.sigmoid(gates[:, 2 * H_PAD:])
    h1 = o_g * jnp.tanh(i_g * g_g)
    z1 = jax.nn.sigmoid(jnp.dot(h1.astype(jnp.bfloat16), packed["w1"],
                                preferred_element_type=jnp.float32) + packed["b1"])
    logits = jnp.dot(z1.astype(jnp.bfloat16), packed["w2"][0:1, :].T,
                     preferred_element_type=jnp.float32) + packed["b2"][0, 0]
    return jax.nn.sigmoid(logits)


if __name__ == "__main__":
    input_dim, hidden_dim, batch_size = 60, 120, 64  # module defaults

    key = jax.random.PRNGKey(0)
    k_params, k_x = jax.random.split(key)

    raw = init_params(k_params, input_dim, hidden_dim)
    packed = pack_params(raw)
    x = jax.random.normal(k_x, (batch_size, input_dim), jnp.float32)

    out = is_good_track_forward(x, packed)
    out = jax.block_until_ready(out)
    assert out.shape == (batch_size, 1)

    # Tight check against a reference that mirrors the kernel's bf16 numerics ...
    ref_bf16 = reference_forward_bf16(x, packed)
    assert jnp.max(jnp.abs(out - ref_bf16)) < 5e-3
    # ... and a looser check against the full-f32 original math (bf16 weight rounding).
    ref_f32 = reference_forward_f32(x, raw)
    assert jnp.max(jnp.abs(out - ref_f32)) < 3e-2

    print("KERNEL_OK")
</pallas_src>

<mosaic_0001>
module attributes {stable_mosaic.version = 11 : i64} {
  func.func @is_good_track_kernel(%arg0: i32, %arg1: memref<128x128xbf16, #tpu.memory_space<vmem>>, %arg2: memref<128x384xbf16, #tpu.memory_space<vmem>>, %arg3: memref<1x384xf32, #tpu.memory_space<vmem>>, %arg4: memref<128x128xbf16, #tpu.memory_space<vmem>>, %arg5: memref<1x128xf32, #tpu.memory_space<vmem>>, %arg6: memref<8x128xbf16, #tpu.memory_space<vmem>>, %arg7: memref<1x1xf32, #tpu.memory_space<smem>>, %arg8: memref<1x128xf32, #tpu.memory_space<vmem>>) attributes {dimension_semantics = [#tpu.dimension_semantics<arbitrary>], iteration_bounds = array<i64: 1>, scalar_prefetch = 0 : i64, scratch_operands = 0 : i64, tpu.core_type = #tpu.core_type<tc>, window_params = [{transform_indices = @transform_0, window_bounds = array<i64: 128, 128>}, {pipeline_mode = #tpu.pipeline_mode<synchronous>, transform_indices = @transform_1, window_bounds = array<i64: 128, 384>}, {pipeline_mode = #tpu.pipeline_mode<synchronous>, transform_indices = @transform_2, window_bounds = array<i64: 1, 384>}, {pipeline_mode = #tpu.pipeline_mode<synchronous>, transform_indices = @transform_3, window_bounds = array<i64: 128, 128>}, {pipeline_mode = #tpu.pipeline_mode<synchronous>, transform_indices = @transform_4, window_bounds = array<i64: 1, 128>}, {pipeline_mode = #tpu.pipeline_mode<synchronous>, transform_indices = @transform_5, window_bounds = array<i64: 8, 128>}, {transform_indices = @transform_6, window_bounds = array<i64: 1, 1>}, {transform_indices = @transform_7, window_bounds = array<i64: 1, 128>}]} {
    %c0 = arith.constant 0 : index
    %c0_0 = arith.constant 0 : index
    %0 = vector.load %arg1[%c0, %c0_0] : memref<128x128xbf16, #tpu.memory_space<vmem>>, vector<128x128xbf16>
    %c0_1 = arith.constant 0 : index
    %c0_2 = arith.constant 0 : index
    %1 = vector.load %arg2[%c0_1, %c0_2] : memref<128x384xbf16, #tpu.memory_space<vmem>>, vector<128x384xbf16>
    %cst = arith.constant dense<0.000000e+00> : vector<128x384xf32>
    %2 = tpu.matmul %0, %1, %cst {dimension_numbers = #tpu.dot_dimension_numbers<[1], [0], [0], [1], [0, 0, 1, 1], [], []>} : vector<128x128xbf16>, vector<128x384xbf16>, vector<128x384xf32> -> vector<128x384xf32>
    %c0_3 = arith.constant 0 : index
    %c0_4 = arith.constant 0 : index
    %3 = vector.load %arg3[%c0_3, %c0_4] : memref<1x384xf32, #tpu.memory_space<vmem>>, vector<1x384xf32>
    %4 = vector.broadcast %3 : vector<1x384xf32> to vector<128x384xf32>
    %5 = arith.addf %2, %4 : vector<128x384xf32>
    %6 = vector.extract_strided_slice %5 {offsets = [0, 0], sizes = [128, 128], strides = [1, 1]} : vector<128x384xf32> to vector<128x128xf32>
    %cst_5 = arith.constant -3.000000e+01 : f32
    %cst_6 = arith.constant 3.000000e+01 : f32
    %7 = vector.broadcast %cst_5 : f32 to vector<128x128xf32>
    %8 = arith.maximumf %7, %6 : vector<128x128xf32>
    %9 = vector.broadcast %cst_6 : f32 to vector<128x128xf32>
    %10 = arith.minimumf %9, %8 : vector<128x128xf32>
    %cst_7 = arith.constant 0.000000e+00 : f32
    %11 = vector.broadcast %cst_7 : f32 to vector<128x128xf32>
    %12 = arith.subf %11, %10 : vector<128x128xf32>
    %13 = math.exp %12 : vector<128x128xf32>
    %cst_8 = arith.constant 1.000000e+00 : f32
    %14 = vector.broadcast %cst_8 : f32 to vector<128x128xf32>
    %15 = arith.addf %14, %13 : vector<128x128xf32>
    %16 = tpu.reciprocal %15 {approx = true} : vector<128x128xf32> -> vector<128x128xf32>
    %17 = vector.extract_strided_slice %5 {offsets = [0, 128], sizes = [128, 128], strides = [1, 1]} : vector<128x384xf32> to vector<128x128xf32>
    %18 = math.tanh %17 : vector<128x128xf32>
    %19 = vector.extract_strided_slice %5 {offsets = [0, 256], sizes = [128, 128], strides = [1, 1]} : vector<128x384xf32> to vector<128x128xf32>
    %cst_9 = arith.constant -3.000000e+01 : f32
    %cst_10 = arith.constant 3.000000e+01 : f32
    %20 = vector.broadcast %cst_9 : f32 to vector<128x128xf32>
    %21 = arith.maximumf %20, %19 : vector<128x128xf32>
    %22 = vector.broadcast %cst_10 : f32 to vector<128x128xf32>
    %23 = arith.minimumf %22, %21 : vector<128x128xf32>
    %cst_11 = arith.constant 0.000000e+00 : f32
    %24 = vector.broadcast %cst_11 : f32 to vector<128x128xf32>
    %25 = arith.subf %24, %23 : vector<128x128xf32>
    %26 = math.exp %25 : vector<128x128xf32>
    %cst_12 = arith.constant 1.000000e+00 : f32
    %27 = vector.broadcast %cst_12 : f32 to vector<128x128xf32>
    %28 = arith.addf %27, %26 : vector<128x128xf32>
    %29 = tpu.reciprocal %28 {approx = true} : vector<128x128xf32> -> vector<128x128xf32>
    %30 = arith.mulf %16, %18 : vector<128x128xf32>
    %31 = math.tanh %30 : vector<128x128xf32>
    %32 = arith.mulf %29, %31 : vector<128x128xf32>
    %33 = arith.truncf %32 : vector<128x128xf32> to vector<128x128xbf16>
    %c0_13 = arith.constant 0 : index
    %c0_14 = arith.constant 0 : index
    %34 = vector.load %arg4[%c0_13, %c0_14] : memref<128x128xbf16, #tpu.memory_space<vmem>>, vector<128x128xbf16>
    %cst_15 = arith.constant dense<0.000000e+00> : vector<128x128xf32>
    %35 = tpu.matmul %33, %34, %cst_15 {dimension_numbers = #tpu.dot_dimension_numbers<[1], [0], [0], [1], [0, 0, 1, 1], [], []>} : vector<128x128xbf16>, vector<128x128xbf16>, vector<128x128xf32> -> vector<128x128xf32>
    %c0_16 = arith.constant 0 : index
    %c0_17 = arith.constant 0 : index
    %36 = vector.load %arg5[%c0_16, %c0_17] : memref<1x128xf32, #tpu.memory_space<vmem>>, vector<1x128xf32>
    %37 = vector.broadcast %36 : vector<1x128xf32> to vector<128x128xf32>
    %38 = arith.addf %35, %37 : vector<128x128xf32>
    %cst_18 = arith.constant -3.000000e+01 : f32
    %cst_19 = arith.constant 3.000000e+01 : f32
    %39 = vector.broadcast %cst_18 : f32 to vector<128x128xf32>
    %40 = arith.maximumf %39, %38 : vector<128x128xf32>
    %41 = vector.broadcast %cst_19 : f32 to vector<128x128xf32>
    %42 = arith.minimumf %41, %40 : vector<128x128xf32>
    %cst_20 = arith.constant 0.000000e+00 : f32
    %43 = vector.broadcast %cst_20 : f32 to vector<128x128xf32>
    %44 = arith.subf %43, %42 : vector<128x128xf32>
    %45 = math.exp %44 : vector<128x128xf32>
    %cst_21 = arith.constant 1.000000e+00 : f32
    %46 = vector.broadcast %cst_21 : f32 to vector<128x128xf32>
    %47 = arith.addf %46, %45 : vector<128x128xf32>
    %48 = tpu.reciprocal %47 {approx = true} : vector<128x128xf32> -> vector<128x128xf32>
    %c0_22 = arith.constant 0 : index
    %c0_23 = arith.constant 0 : index
    %49 = vector.load %arg6[%c0_22, %c0_23] : memref<8x128xbf16, #tpu.memory_space<vmem>>, vector<8x128xbf16>
    %50 = arith.truncf %48 : vector<128x128xf32> to vector<128x128xbf16>
    %cst_24 = arith.constant dense<0.000000e+00> : vector<8x128xf32>
    %51 = tpu.matmul %49, %50, %cst_24 {dimension_numbers = #tpu.dot_dimension_numbers<[1], [1], [0], [0], [0, 0, 1, 0], [], []>} : vector<8x128xbf16>, vector<128x128xbf16>, vector<8x128xf32> -> vector<8x128xf32>
    %52 = vector.extract_strided_slice %51 {offsets = [0, 0], sizes = [1, 128], strides = [1, 1]} : vector<8x128xf32> to vector<1x128xf32>
    %c0_25 = arith.constant 0 : index
    %c0_26 = arith.constant 0 : index
    %53 = memref.load %arg7[%c0_25, %c0_26] : memref<1x1xf32, #tpu.memory_space<smem>>
    %54 = vector.broadcast %53 : f32 to vector<1x128xf32>
    %55 = arith.addf %52, %54 : vector<1x128xf32>
    %cst_27 = arith.constant -3.000000e+01 : f32
    %cst_28 = arith.constant 3.000000e+01 : f32
    %56 = vector.broadcast %cst_27 : f32 to vector<1x128xf32>
    %57 = arith.maximumf %56, %55 : vector<1x128xf32>
    %58 = vector.broadcast %cst_28 : f32 to vector<1x128xf32>
    %59 = arith.minimumf %58, %57 : vector<1x128xf32>
    %cst_29 = arith.constant 0.000000e+00 : f32
    %60 = vector.broadcast %cst_29 : f32 to vector<1x128xf32>
    %61 = arith.subf %60, %59 : vector<1x128xf32>
    %62 = math.exp %61 : vector<1x128xf32>
    %cst_30 = arith.constant 1.000000e+00 : f32
    %63 = vector.broadcast %cst_30 : f32 to vector<1x128xf32>
    %64 = arith.addf %63, %62 : vector<1x128xf32>
    %cst_31 = arith.constant 1.000000e+00 : f32
    %65 = vector.broadcast %cst_31 : f32 to vector<1x128xf32>
    %66 = arith.divf %65, %64 : vector<1x128xf32>
    %c0_32 = arith.constant 0 : index
    %c0_33 = arith.constant 0 : index
    %67 = vector.load %arg8[%c0_32, %c0_33] : memref<1x128xf32, #tpu.memory_space<vmem>>, vector<1x128xf32>
    tpu.vector_store %arg8[%c0_32, %c0_33], %66 {strides = array<i32>} : memref<1x128xf32, #tpu.memory_space<vmem>>, vector<1x128xf32>,
    return
  }
  func.func @transform_0(%arg0: i32) -> (i32, i32) {
    %c0_i32 = arith.constant 0 : i32
    %c0_i32_0 = arith.constant 0 : i32
    return %arg0, %c0_i32 : i32, i32
  }
  func.func @transform_1(%arg0: i32) -> (i32, i32) {
    %c0_i32 = arith.constant 0 : i32
    %c0_i32_0 = arith.constant 0 : i32
    %c0_i32_1 = arith.constant 0 : i32
    return %c0_i32, %c0_i32_0 : i32, i32
  }
  func.func @transform_2(%arg0: i32) -> (i32, i32) {
    %c0_i32 = arith.constant 0 : i32
    %c0_i32_0 = arith.constant 0 : i32
    %c0_i32_1 = arith.constant 0 : i32
    return %c0_i32, %c0_i32_0 : i32, i32
  }
  func.func @transform_3(%arg0: i32) -> (i32, i32) {
    %c0_i32 = arith.constant 0 : i32
    %c0_i32_0 = arith.constant 0 : i32
    %c0_i32_1 = arith.constant 0 : i32
    return %c0_i32, %c0_i32_0 : i32, i32
  }
  func.func @transform_4(%arg0: i32) -> (i32, i32) {
    %c0_i32 = arith.constant 0 : i32
    %c0_i32_0 = arith.constant 0 : i32
    %c0_i32_1 = arith.constant 0 : i32
    return %c0_i32, %c0_i32_0 : i32, i32
  }
  func.func @transform_5(%arg0: i32) -> (i32, i32) {
    %c0_i32 = arith.constant 0 : i32
    %c0_i32_0 = arith.constant 0 : i32
    %c0_i32_1 = arith.constant 0 : i32
    return %c0_i32, %c0_i32_0 : i32, i32
  }
  func.func @transform_6(%arg0: i32) -> (i32, i32) {
    %c0_i32 = arith.constant 0 : i32
    %c0_i32_0 = arith.constant 0 : i32
    %c0_i32_1 = arith.constant 0 : i32
    return %c0_i32, %c0_i32_0 : i32, i32
  }
  func.func @transform_7(%arg0: i32) -> (i32, i32) {
    %c0_i32 = arith.constant 0 : i32
    %c0_i32_0 = arith.constant 0 : i32
    return %c0_i32, %arg0 : i32, i32
  }
}

</mosaic_0001>

<llo_original>
// kernel: tpu_custom_call.1
$region0: #{tpu_custom_call.1}
  #allocation0 [shape = 'u32[]', space=smem, size = 0x4, offset = 0x4, fixed_abs, tag = 'smem constant byte address 0x4 - core index']
  #allocation1 [shape = 'u32[144,128]{1,0:T(1,128)}', space=vmem, size = 0x12000, scoped, tag = 'internal scratch']
  #allocation2 [shape = 'f32[1,1]{1,0:T(1,128)S(6)}', space=smem, size = 0x200, scoped, tag = 'scoped memory for tpu_custom_call.1']
  %s0 = inlined_call_operand.hbm [shape: bf16[128,128], index: 0, kind: input, shape index: {}]
  %s1 = inlined_call_operand.hbm [shape: bf16[128,384], index: 1, kind: input, shape index: {}]
  %s2 = inlined_call_operand.vmem [shape: f32[1,384], index: 2, kind: input, shape index: {}]
  %s3 = inlined_call_operand.hbm [shape: bf16[128,128], index: 3, kind: input, shape index: {}]
  %s4 = inlined_call_operand.vmem [shape: f32[1,128], index: 4, kind: input, shape index: {}]
  %s5 = inlined_call_operand.vmem [shape: bf16[8,128], index: 5, kind: input, shape index: {}]
  %s6 = inlined_call_operand.<no memory space> [shape: f32[1,1], index: 6, kind: input, shape index: {}]
  %s7 = inlined_call_operand.hbm [shape: f32[1,128], index: 7, kind: output, shape index: {}]
  %s8 = sld [smem:[#allocation0]]
  $region50: #{tpu_custom_call.1} parent=0
    _
  %s10 = ssub.s32 1, %s8
  %s11 = scalar_select 0, %s10, %s8
  %12 = sst [smem:[#allocation2]] %s6
  $region1: #{tpu_custom_call.1} parent=0
    #allocation3 [shape = 'u8[32768]{0}', space=vmem, size = 0x8000, scoped, tag = 'input window, operand 0, single buffered']
    #allocation4 [shape = 's32[1]{0}', space=sflag, size = 0x4, scoped, tag = 'scoped memory for tpu_custom_call.1']
    #allocation5 [shape = 's32[1]{0}', space=sflag, size = 0x4, scoped, tag = 'scoped memory for tpu_custom_call.1']
    #allocation6 [shape = 'u8[98304]{0}', space=vmem, size = 0x18000, scoped, tag = 'input window, operand 1, single buffered']
    #allocation7 [shape = 's32[1]{0}', space=sflag, size = 0x4, scoped, tag = 'scoped memory for tpu_custom_call.1']
    #allocation8 [shape = 'u8[32768]{0}', space=vmem, size = 0x8000, scoped, tag = 'input window, operand 3, single buffered']
    #allocation9 [shape = 'u8[512]{0}', space=vmem, size = 0x400, scoped, tag = 'output window, operand 0, single buffered']
    %13 = vsyncpa [#allocation4], 0
    %14 = vsyncpa [#allocation7], 0
    %15 = vsyncpa [#allocation5], 0
    // Predicated region
    $region2: #{tpu_custom_call.1} parent=1 // pred_check
      _
    $region3: #{tpu_custom_call.1} parent=1 // pred_check_branch
      %17 = sbr.rel (0) target = $region5
    $region4: #{tpu_custom_call.1} parent=1 // pred_region
      %s19 = ssub.s32 1024, 1024
      %20 = vsyncadd [#allocation4], %s19
      %s21 = sshll.u32 [#allocation3], 4
      %s22 = int_to_ptr.vmem [resolvable:$true] %s21
      %27 = dma.hbm_to_vmem [thread:$0]  %s0, 1024, %s22, [#allocation4], 64, 64, 4
    $region5: #{tpu_custom_call.1} parent=1 // pred_fallthru
      _
    // Predicated region
    $region6: #{tpu_custom_call.1} parent=1 // pred_check
      _
    $region7: #{tpu_custom_call.1} parent=1 // pred_check_branch
      %29 = sbr.rel (0) target = $region9
    $region8: #{tpu_custom_call.1} parent=1 // pred_region
      %s31 = ssub.s32 3072, 3072
      %32 = vsyncadd [#allocation7], %s31
      %s33 = sshll.u32 [#allocation6], 4
      %s34 = int_to_ptr.vmem [resolvable:$true] %s33
      %39 = dma.hbm_to_vmem [thread:$0]  %s1, 3072, %s34, [#allocation7], 192, 192, 12
    $region9: #{tpu_custom_call.1} parent=1 // pred_fallthru
      _
    // Predicated region
    $region10: #{tpu_custom_call.1} parent=1 // pred_check
      _
    $region11: #{tpu_custom_call.1} parent=1 // pred_check_branch
      %41 = sbr.rel (0) target = $region13
    $region12: #{tpu_custom_call.1} parent=1 // pred_region
      _
    $region13: #{tpu_custom_call.1} parent=1 // pred_fallthru
      _
    // Predicated region
    $region14: #{tpu_custom_call.1} parent=1 // pred_check
      _
    $region15: #{tpu_custom_call.1} parent=1 // pred_check_branch
      %43 = sbr.rel (0) target = $region17
    $region16: #{tpu_custom_call.1} parent=1 // pred_region
      %s45 = ssub.s32 1024, 1024
      %46 = vsyncadd [#allocation7], %s45
      %s47 = sshll.u32 [#allocation8], 4
      %s48 = int_to_ptr.vmem [resolvable:$true] %s47
      %53 = dma.hbm_to_vmem [thread:$0]  %s3, 1024, %s48, [#allocation7], 64, 64, 4
    $region17: #{tpu_custom_call.1} parent=1 // pred_fallthru
      _
    // Predicated region
    $region18: #{tpu_custom_call.1} parent=1 // pred_check
      _
    $region19: #{tpu_custom_call.1} parent=1 // pred_check_branch
      %55 = sbr.rel (0) target = $region21
    $region20: #{tpu_custom_call.1} parent=1 // pred_region
      _
    $region21: #{tpu_custom_call.1} parent=1 // pred_fallthru
      _
    // Predicated region
    $region22: #{tpu_custom_call.1} parent=1 // pred_check
      _
    $region23: #{tpu_custom_call.1} parent=1 // pred_check_branch
      %57 = sbr.rel (0) target = $region25
    $region24: #{tpu_custom_call.1} parent=1 // pred_region
      _
    $region25: #{tpu_custom_call.1} parent=1 // pred_fallthru
      _
    // Predicated region
    $region26: #{tpu_custom_call.1} parent=1 // pred_check
      _
    $region27: #{tpu_custom_call.1} parent=1 // pred_check_branch
      %59 = sbr.rel (0) target = $region29
    $region28: #{tpu_custom_call.1} parent=1 // pred_region
      _
    $region29: #{tpu_custom_call.1} parent=1 // pred_fallthru
      _
    // Predicated region
    $region30: #{tpu_custom_call.1} parent=1 // pred_check
      _
    $region31: #{tpu_custom_call.1} parent=1 // pred_check_branch
      %61 = sbr.rel (0) target = $region33
    $region32: #{tpu_custom_call.1} parent=1 // pred_region
      %62 = dma.done [#allocation4], 1024
    $region33: #{tpu_custom_call.1} parent=1 // pred_fallthru
      _
    // Predicated region
    $region34: #{tpu_custom_call.1} parent=1 // pred_check
      _
    $region35: #{tpu_custom_call.1} parent=1 // pred_check_branch
      %64 = sbr.rel (0) target = $region37
    $region36: #{tpu_custom_call.1} parent=1 // pred_region
      %65 = dma.done [#allocation7], 3072
    $region37: #{tpu_custom_call.1} parent=1 // pred_fallthru
      _
    // Predicated region
    $region38: #{tpu_custom_call.1} parent=1 // pred_check
      _
    $region39: #{tpu_custom_call.1} parent=1 // pred_check_branch
      %67 = sbr.rel (0) target = $region41
    $region40: #{tpu_custom_call.1} parent=1 // pred_region
      %68 = dma.done [#allocation7], 1024
    $region41: #{tpu_custom_call.1} parent=1 // pred_fallthru
      _
    %v70 = vld [vmem:[#allocation3] sm:$0xf]
    %v71 = vld [vmem:[#allocation3 + $0x4] sm:$0xf]
    %v72 = vld [vmem:[#allocation3 + $0x8] sm:$0xf]
    %v73 = vld [vmem:[#allocation3 + $0xc] sm:$0xf]
    %v74 = vld [vmem:[#allocation3 + $0x10] sm:$0xf]
    %v75 = vld [vmem:[#allocation3 + $0x14] sm:$0xf]
    %v76 = vld [vmem:[#allocation3 + $0x18] sm:$0xf]
    %v77 = vld [vmem:[#allocation3 + $0x1c] sm:$0xf]
    %v78 = vld [vmem:[#allocation3 + $0x20] sm:$0xf]
    %v79 = vld [vmem:[#allocation3 + $0x24] sm:$0xf]
    %v80 = vld [vmem:[#allocation3 + $0x28] sm:$0xf]
    %v81 = vld [vmem:[#allocation3 + $0x2c] sm:$0xf]
    %v82 = vld [vmem:[#allocation3 + $0x30] sm:$0xf]
    %v83 = vld [vmem:[#allocation3 + $0x34] sm:$0xf]
    %v84 = vld [vmem:[#allocation3 + $0x38] sm:$0xf]
    %v85 = vld [vmem:[#allocation3 + $0x3c] sm:$0xf]
    %v86 = vld [vmem:[#allocation6] sm:$0xff]
    %v87 = vld [vmem:[#allocation6 + $0x8] sm:$0xf]
    %v88 = vld [vmem:[#allocation6 + $0xc] sm:$0xff]
    %v89 = vld [vmem:[#allocation6 + $0x14] sm:$0xf]
    %v90 = vld [vmem:[#allocation6 + $0x18] sm:$0xff]
    %v91 = vld [vmem:[#allocation6 + $0x20] sm:$0xf]
    %v92 = vld [vmem:[#allocation6 + $0x24] sm:$0xff]
    %v93 = vld [vmem:[#allocation6 + $0x2c] sm:$0xf]
    %v94 = vld [vmem:[#allocation6 + $0x30] sm:$0xff]
    %v95 = vld [vmem:[#allocation6 + $0x38] sm:$0xf]
    %v96 = vld [vmem:[#allocation6 + $0x3c] sm:$0xff]
    %v97 = vld [vmem:[#allocation6 + $0x44] sm:$0xf]
    %v98 = vld [vmem:[#allocation6 + $0x48] sm:$0xff]
    %v99 = vld [vmem:[#allocation6 + $0x50] sm:$0xf]
    %v100 = vld [vmem:[#allocation6 + $0x54] sm:$0xff]
    %v101 = vld [vmem:[#allocation6 + $0x5c] sm:$0xf]
    %v102 = vld [vmem:[#allocation6 + $0x60] sm:$0xff]
    %v103 = vld [vmem:[#allocation6 + $0x68] sm:$0xf]
    %v104 = vld [vmem:[#allocation6 + $0x6c] sm:$0xff]
    %v105 = vld [vmem:[#allocation6 + $0x74] sm:$0xf]
    %v106 = vld [vmem:[#allocation6 + $0x78] sm:$0xff]
    %v107 = vld [vmem:[#allocation6 + $0x80] sm:$0xf]
    %v108 = vld [vmem:[#allocation6 + $0x84] sm:$0xff]
    %v109 = vld [vmem:[#allocation6 + $0x8c] sm:$0xf]
    %v110 = vld [vmem:[#allocation6 + $0x90] sm:$0xff]
    %v111 = vld [vmem:[#allocation6 + $0x98] sm:$0xf]
    %v112 = vld [vmem:[#allocation6 + $0x9c] sm:$0xff]
    %v113 = vld [vmem:[#allocation6 + $0xa4] sm:$0xf]
    %v114 = vld [vmem:[#allocation6 + $0xa8] sm:$0xff]
    %v115 = vld [vmem:[#allocation6 + $0xb0] sm:$0xf]
    %v116 = vld [vmem:[#allocation6 + $0xb4] sm:$0xff]
    %v117 = vld [vmem:[#allocation6 + $0xbc] sm:$0xf]
    %v118 = vld [vmem:[%s2] sm:$0x7]
    %v120 = vlaneseq
    %v121 = vshrl.u32 %v120, 7
    %v122 = vsub.s32 0, %v121
    %v123 = vrot.slane %v118, %v122
    %v124 = vlaneseq
    %v125 = vshrl.u32 %v124, 7
    %v126 = vsub.s32 1, %v125
    %v127 = vrot.slane %v118, %v126
    %v128 = vlaneseq
    %v129 = vshrl.u32 %v128, 7
    %v130 = vsub.s32 2, %v129
    %v131 = vrot.slane %v118, %v130
    %v151 = vunpack.c.l.b16 %v70
    %v152 = vunpack.c.l.b16 %v71
    %v153 = vunpack.c.l.b16 %v72
    %v154 = vunpack.c.l.b16 %v73
    %v155 = vunpack.c.l.b16 %v74
    %v156 = vunpack.c.l.b16 %v75
    %v157 = vunpack.c.l.b16 %v76
    %v158 = vunpack.c.l.b16 %v77
    %v159 = vunpack.c.l.b16 %v78
    %v160 = vunpack.c.l.b16 %v79
    %v161 = vunpack.c.l.b16 %v80
    %v162 = vunpack.c.l.b16 %v81
    %v163 = vunpack.c.l.b16 %v82
    %v164 = vunpack.c.l.b16 %v83
    %v165 = vunpack.c.l.b16 %v84
    %v166 = vunpack.c.l.b16 %v85
    %v167 = vpack.c.b16 %v152, %v151
    %v168 = vpack.c.b16 %v154, %v153
    %v169 = vpack.c.b16 %v156, %v155
    %v170 = vpack.c.b16 %v158, %v157
    %v171 = vpack.c.b16 %v160, %v159
    %v172 = vpack.c.b16 %v162, %v161
    %v173 = vpack.c.b16 %v164, %v163
    %v174 = vpack.c.b16 %v166, %v165
    %v215 = vunpack.c.l.b16 %v86
    %v216 = vunpack.c.h.b16 %v86
    %v217 = vunpack.c.l.b16 %v87
    %v218 = vunpack.c.l.b16 %v88
    %v219 = vunpack.c.h.b16 %v88
    %v220 = vunpack.c.l.b16 %v89
    %v221 = vunpack.c.l.b16 %v90
    %v222 = vunpack.c.h.b16 %v90
    %v223 = vunpack.c.l.b16 %v91
    %v224 = vunpack.c.l.b16 %v92
    %v225 = vunpack.c.h.b16 %v92
    %v226 = vunpack.c.l.b16 %v93
    %v227 = vunpack.c.l.b16 %v94
    %v228 = vunpack.c.h.b16 %v94
    %v229 = vunpack.c.l.b16 %v95
    %v230 = vunpack.c.l.b16 %v96
    %v231 = vunpack.c.h.b16 %v96
    %v232 = vunpack.c.l.b16 %v97
    %v233 = vunpack.c.l.b16 %v98
    %v234 = vunpack.c.h.b16 %v98
    %v235 = vunpack.c.l.b16 %v99
    %v236 = vunpack.c.l.b16 %v100
    %v237 = vunpack.c.h.b16 %v100
    %v238 = vunpack.c.l.b16 %v101
    %v239 = vunpack.c.l.b16 %v102
    %v240 = vunpack.c.h.b16 %v102
    %v241 = vunpack.c.l.b16 %v103
    %v242 = vunpack.c.l.b16 %v104
    %v243 = vunpack.c.h.b16 %v104
    %v244 = vunpack.c.l.b16 %v105
    %v245 = vunpack.c.l.b16 %v106
    %v246 = vunpack.c.h.b16 %v106
    %v247 = vunpack.c.l.b16 %v107
    %v248 = vunpack.c.l.b16 %v108
    %v249 = vunpack.c.h.b16 %v108
    %v250 = vunpack.c.l.b16 %v109
    %v251 = vunpack.c.l.b16 %v110
    %v252 = vunpack.c.h.b16 %v110
    %v253 = vunpack.c.l.b16 %v111
    %v254 = vunpack.c.l.b16 %v112
    %v255 = vunpack.c.h.b16 %v112
    %v256 = vunpack.c.l.b16 %v113
    %v257 = vunpack.c.l.b16 %v114
    %v258 = vunpack.c.h.b16 %v114
    %v259 = vunpack.c.l.b16 %v115
    %v260 = vunpack.c.l.b16 %v116
    %v261 = vunpack.c.h.b16 %v116
    %v262 = vunpack.c.l.b16 %v117
    %v263 = vpack.c.b16 %v218, %v215
    %v264 = vpack.c.b16 %v219, %v216
    %v265 = vpack.c.b16 %v220, %v217
    %v266 = vpack.c.b16 %v224, %v221
    %v267 = vpack.c.b16 %v225, %v222
    %v268 = vpack.c.b16 %v226, %v223
    %v269 = vpack.c.b16 %v230, %v227
    %v270 = vpack.c.b16 %v231, %v228
    %v271 = vpack.c.b16 %v232, %v229
    %v272 = vpack.c.b16 %v236, %v233
    %v273 = vpack.c.b16 %v237, %v234
    %v274 = vpack.c.b16 %v238, %v235
    %v275 = vpack.c.b16 %v242, %v239
    %v276 = vpack.c.b16 %v243, %v240
    %v277 = vpack.c.b16 %v244, %v241
    %v278 = vpack.c.b16 %v248, %v245
    %v279 = vpack.c.b16 %v249, %v246
    %v280 = vpack.c.b16 %v250, %v247
    %v281 = vpack.c.b16 %v254, %v251
    %v282 = vpack.c.b16 %v255, %v252
    %v283 = vpack.c.b16 %v256, %v253
    %v284 = vpack.c.b16 %v260, %v257
    %v285 = vpack.c.b16 %v261, %v258
    %v286 = vpack.c.b16 %v262, %v259
    %311 = vmatprep.subr.bf16.mxu0 %v264
    %312 = vmatpush1.bf16.msra.mxu0 %v263
    %313 = vmatprep.subr.bf16.mxu0 %v267
    %314 = vmatpush1.bf16.msra.mxu0 %v266
    %315 = vmatprep.subr.bf16.mxu0 %v270
    %316 = vmatpush1.bf16.msra.mxu0 %v269
    %317 = vmatprep.subr.bf16.mxu0 %v273
    %318 = vmatpush1.bf16.msra.mxu0 %v272
    %319 = vmatprep.subr.bf16.mxu0 %v276
    %320 = vmatpush1.bf16.msra.mxu0 %v275
    %321 = vmatprep.subr.bf16.mxu0 %v279
    %322 = vmatpush1.bf16.msra.mxu0 %v278
    %323 = vmatprep.subr.bf16.mxu0 %v282
    %324 = vmatpush1.bf16.msra.mxu0 %v281
    %325 = vmatprep.subr.bf16.mxu0 %v285
    %326 = vmatpush1.bf16.msra.mxu0 %v284
    %327 = vmatprep.subr.bf16.mxu0 0
    %328 = vmatpush1.bf16.msra.mxu0 0
    %329 = vmatprep.subr.bf16.mxu0 0
    %330 = vmatpush1.bf16.msra.mxu0 0
    %331 = vmatprep.subr.bf16.mxu0 0
    %332 = vmatpush1.bf16.msra.mxu0 0
    %333 = vmatprep.subr.bf16.mxu0 0
    %334 = vmatpush1.bf16.msra.mxu0 0
    %335 = vmatprep.subr.bf16.mxu0 0
    %336 = vmatpush1.bf16.msra.mxu0 0
    %337 = vmatprep.subr.bf16.mxu0 0
    %338 = vmatpush1.bf16.msra.mxu0 0
    %339 = vmatprep.subr.bf16.mxu0 0
    %340 = vmatpush1.bf16.msra.mxu0 0
    %341 = vmatprep.subr.bf16.mxu0 0
    %342 = vmatpush1.bf16.msra.mxu0 0
    %343 = vmatprep.mubr.bf16.mxu0 0
    %344 = vmatmul.mubr.bf16.gmra.mrb[0].mxu0 %v167
    %v345 = vpop.f32.mrb[0].mxu0
    %v346 = vadd.f32 %v123, %v345
    %v347 = vpop.f32.mrb[0].mxu0
    %v348 = vadd.f32 %v127, %v347
    %v349 = vpop.f32.mrb[0].mxu0
    %v350 = vadd.f32 %v123, %v349
    %v351 = vpop.f32.mrb[0].mxu0
    %v352 = vadd.f32 %v127, %v351
    %353 = vmatprep.mubr.bf16.mxu0 0
    %354 = vmatmul.mubr.bf16.gmra.mrb[0].mxu0 %v168
    %v355 = vpop.f32.mrb[0].mxu0
    %v356 = vadd.f32 %v123, %v355
    %v357 = vpop.f32.mrb[0].mxu0
    %v358 = vadd.f32 %v127, %v357
    %v359 = vpop.f32.mrb[0].mxu0
    %v360 = vadd.f32 %v123, %v359
    %v361 = vpop.f32.mrb[0].mxu0
    %v362 = vadd.f32 %v127, %v361
    %363 = vmatprep.mubr.bf16.mxu0 0
    %364 = vmatmul.mubr.bf16.gmra.mrb[0].mxu0 %v169
    %v365 = vpop.f32.mrb[0].mxu0
    %v366 = vadd.f32 %v123, %v365
    %v367 = vpop.f32.mrb[0].mxu0
    %v368 = vadd.f32 %v127, %v367
    %v369 = vpop.f32.mrb[0].mxu0
    %v370 = vadd.f32 %v123, %v369
    %v371 = vpop.f32.mrb[0].mxu0
    %v372 = vadd.f32 %v127, %v371
    %373 = vmatprep.mubr.bf16.mxu0 0
    %374 = vmatmul.mubr.bf16.gmra.mrb[0].mxu0 %v170
    %v375 = vpop.f32.mrb[0].mxu0
    %v376 = vadd.f32 %v123, %v375
    %v377 = vpop.f32.mrb[0].mxu0
    %v378 = vadd.f32 %v127, %v377
    %v379 = vpop.f32.mrb[0].mxu0
    %v380 = vadd.f32 %v123, %v379
    %v381 = vpop.f32.mrb[0].mxu0
    %v382 = vadd.f32 %v127, %v381
    %383 = vmatprep.mubr.bf16.mxu0 0
    %384 = vmatmul.mubr.bf16.gmra.mrb[0].mxu0 %v171
    %v385 = vpop.f32.mrb[0].mxu0
    %v386 = vadd.f32 %v123, %v385
    %v387 = vpop.f32.mrb[0].mxu0
    %v388 = vadd.f32 %v127, %v387
    %v389 = vpop.f32.mrb[0].mxu0
    %v390 = vadd.f32 %v123, %v389
    %v391 = vpop.f32.mrb[0].mxu0
    %v392 = vadd.f32 %v127, %v391
    %393 = vmatprep.mubr.bf16.mxu0 0
    %394 = vmatmul.mubr.bf16.gmra.mrb[0].mxu0 %v172
    %v395 = vpop.f32.mrb[0].mxu0
    %v396 = vadd.f32 %v123, %v395
    %v397 = vpop.f32.mrb[0].mxu0
    %v398 = vadd.f32 %v127, %v397
    %v399 = vpop.f32.mrb[0].mxu0
    %v400 = vadd.f32 %v123, %v399
    %v401 = vpop.f32.mrb[0].mxu0
    %v402 = vadd.f32 %v127, %v401
    %403 = vmatprep.mubr.bf16.mxu0 0
    %404 = vmatmul.mubr.bf16.gmra.mrb[0].mxu0 %v173
    %v405 = vpop.f32.mrb[0].mxu0
    %v406 = vadd.f32 %v123, %v405
    %v407 = vpop.f32.mrb[0].mxu0
    %v408 = vadd.f32 %v127, %v407
    %v409 = vpop.f32.mrb[0].mxu0
    %v410 = vadd.f32 %v123, %v409
    %v411 = vpop.f32.mrb[0].mxu0
    %v412 = vadd.f32 %v127, %v411
    %413 = vmatprep.mubr.bf16.mxu0 0
    %414 = vmatmul.mubr.bf16.gmra.mrb[0].mxu0 %v174
    %v415 = vpop.f32.mrb[0].mxu0
    %v416 = vadd.f32 %v123, %v415
    %v417 = vpop.f32.mrb[0].mxu0
    %v418 = vadd.f32 %v127, %v417
    %v419 = vpop.f32.mrb[0].mxu0
    %v420 = vadd.f32 %v123, %v419
    %v421 = vpop.f32.mrb[0].mxu0
    %v422 = vadd.f32 %v127, %v421
    %423 = vdwg.mxu0
    %424 = vmatprep.subr.bf16.mxu0 0
    %425 = vmatpush1.bf16.msra.mxu0 %v265
    %426 = vmatprep.subr.bf16.mxu0 0
    %427 = vmatpush1.bf16.msra.mxu0 %v268
    %428 = vmatprep.subr.bf16.mxu0 0
    %429 = vmatpush1.bf16.msra.mxu0 %v271
    %430 = vmatprep.subr.bf16.mxu0 0
    %431 = vmatpush1.bf16.msra.mxu0 %v274
    %432 = vmatprep.subr.bf16.mxu0 0
    %433 = vmatpush1.bf16.msra.mxu0 %v277
    %434 = vmatprep.subr.bf16.mxu0 0
    %435 = vmatpush1.bf16.msra.mxu0 %v280
    %436 = vmatprep.subr.bf16.mxu0 0
    %437 = vmatpush1.bf16.msra.mxu0 %v283
    %438 = vmatprep.subr.bf16.mxu0 0
    %439 = vmatpush1.bf16.msra.mxu0 %v286
    %440 = vmatprep.subr.bf16.mxu0 0
    %441 = vmatpush1.bf16.msra.mxu0 0
    %442 = vmatprep.subr.bf16.mxu0 0
    %443 = vmatpush1.bf16.msra.mxu0 0
    %444 = vmatprep.subr.bf16.mxu0 0
    %445 = vmatpush1.bf16.msra.mxu0 0
    %446 = vmatprep.subr.bf16.mxu0 0
    %447 = vmatpush1.bf16.msra.mxu0 0
    %448 = vmatprep.subr.bf16.mxu0 0
    %449 = vmatpush1.bf16.msra.mxu0 0
    %450 = vmatprep.subr.bf16.mxu0 0
    %451 = vmatpush1.bf16.msra.mxu0 0
    %452 = vmatprep.subr.bf16.mxu0 0
    %453 = vmatpush1.bf16.msra.mxu0 0
    %454 = vmatprep.subr.bf16.mxu0 0
    %455 = vmatpush1.bf16.msra.mxu0 0
    %456 = vmatprep.mubr.bf16.mxu0 0
    %457 = vmatmul.mubr.bf16.gmra.mrb[0].mxu0 %v167
    %v458 = vpop.f32.mrb[0].mxu0
    %v459 = vadd.f32 %v131, %v458
    %v460 = vpop.f32.mrb[0].mxu0
    %v461 = vpop.f32.mrb[0].mxu0
    %v462 = vadd.f32 %v131, %v461
    %v463 = vpop.f32.mrb[0].mxu0
    %464 = vmatprep.mubr.bf16.mxu0 0
    %465 = vmatmul.mubr.bf16.gmra.mrb[0].mxu0 %v168
    %v466 = vpop.f32.mrb[0].mxu0
    %v467 = vadd.f32 %v131, %v466
    %v468 = vpop.f32.mrb[0].mxu0
    %v469 = vpop.f32.mrb[0].mxu0
    %v470 = vadd.f32 %v131, %v469
    %v471 = vpop.f32.mrb[0].mxu0
    %472 = vmatprep.mubr.bf16.mxu0 0
    %473 = vmatmul.mubr.bf16.gmra.mrb[0].mxu0 %v169
    %v474 = vpop.f32.mrb[0].mxu0
    %v475 = vadd.f32 %v131, %v474
    %v476 = vpop.f32.mrb[0].mxu0
    %v477 = vpop.f32.mrb[0].mxu0
    %v478 = vadd.f32 %v131, %v477
    %v479 = vpop.f32.mrb[0].mxu0
    %480 = vmatprep.mubr.bf16.mxu0 0
    %481 = vmatmul.mubr.bf16.gmra.mrb[0].mxu0 %v170
    %v482 = vpop.f32.mrb[0].mxu0
    %v483 = vadd.f32 %v131, %v482
    %v484 = vpop.f32.mrb[0].mxu0
    %v485 = vpop.f32.mrb[0].mxu0
    %v486 = vadd.f32 %v131, %v485
    %v487 = vpop.f32.mrb[0].mxu0
    %488 = vmatprep.mubr.bf16.mxu0 0
    %489 = vmatmul.mubr.bf16.gmra.mrb[0].mxu0 %v171
    %v490 = vpop.f32.mrb[0].mxu0
    %v491 = vadd.f32 %v131, %v490
    %v492 = vpop.f32.mrb[0].mxu0
    %v493 = vpop.f32.mrb[0].mxu0
    %v494 = vadd.f32 %v131, %v493
    %v495 = vpop.f32.mrb[0].mxu0
    %496 = vmatprep.mubr.bf16.mxu0 0
    %497 = vmatmul.mubr.bf16.gmra.mrb[0].mxu0 %v172
    %v498 = vpop.f32.mrb[0].mxu0
    %v499 = vadd.f32 %v131, %v498
    %v500 = vpop.f32.mrb[0].mxu0
    %v501 = vpop.f32.mrb[0].mxu0
    %v502 = vadd.f32 %v131, %v501
    %v503 = vpop.f32.mrb[0].mxu0
    %504 = vmatprep.mubr.bf16.mxu0 0
    %505 = vmatmul.mubr.bf16.gmra.mrb[0].mxu0 %v173
    %v506 = vpop.f32.mrb[0].mxu0
    %v507 = vadd.f32 %v131, %v506
    %v508 = vpop.f32.mrb[0].mxu0
    %v509 = vpop.f32.mrb[0].mxu0
    %v510 = vadd.f32 %v131, %v509
    %v511 = vpop.f32.mrb[0].mxu0
    %512 = vmatprep.mubr.bf16.mxu0 0
    %513 = vmatmul.mubr.bf16.gmra.mrb[0].mxu0 %v174
    %v514 = vpop.f32.mrb[0].mxu0
    %v515 = vadd.f32 %v131, %v514
    %v516 = vpop.f32.mrb[0].mxu0
    %v517 = vpop.f32.mrb[0].mxu0
    %v518 = vadd.f32 %v131, %v517
    %v519 = vpop.f32.mrb[0].mxu0
    %520 = vdwg.mxu0
    %v521 = vmax.f32 %v346, -30.0
    %v522 = vmax.f32 %v350, -30.0
    %v523 = vmax.f32 %v356, -30.0
    %v524 = vmax.f32 %v360, -30.0
    %v525 = vmax.f32 %v366, -30.0
    %v526 = vmax.f32 %v370, -30.0
    %v527 = vmax.f32 %v376, -30.0
    %v528 = vmax.f32 %v380, -30.0
    %v529 = vmax.f32 %v386, -30.0
    %v530 = vmax.f32 %v390, -30.0
    %v531 = vmax.f32 %v396, -30.0
    %v532 = vmax.f32 %v400, -30.0
    %v533 = vmax.f32 %v406, -30.0
    %v534 = vmax.f32 %v410, -30.0
    %v535 = vmax.f32 %v416, -30.0
    %v536 = vmax.f32 %v420, -30.0
    %v537 = vmin.f32 %v521, 30.0
    %v538 = vmin.f32 %v522, 30.0
    %v539 = vmin.f32 %v523, 30.0
    %v540 = vmin.f32 %v524, 30.0
    %v541 = vmin.f32 %v525, 30.0
    %v542 = vmin.f32 %v526, 30.0
    %v543 = vmin.f32 %v527, 30.0
    %v544 = vmin.f32 %v528, 30.0
    %v545 = vmin.f32 %v529, 30.0
    %v546 = vmin.f32 %v530, 30.0
    %v547 = vmin.f32 %v531, 30.0
    %v548 = vmin.f32 %v532, 30.0
    %v549 = vmin.f32 %v533, 30.0
    %v550 = vmin.f32 %v534, 30.0
    %v551 = vmin.f32 %v535, 30.0
    %v552 = vmin.f32 %v536, 30.0
    %v553 = vsub.f32 0.0, %v537
    %v554 = vsub.f32 0.0, %v538
    %v555 = vsub.f32 0.0, %v539
    %v556 = vsub.f32 0.0, %v540
    %v557 = vsub.f32 0.0, %v541
    %v558 = vsub.f32 0.0, %v542
    %v559 = vsub.f32 0.0, %v543
    %v560 = vsub.f32 0.0, %v544
    %v561 = vsub.f32 0.0, %v545
    %v562 = vsub.f32 0.0, %v546
    %v563 = vsub.f32 0.0, %v547
    %v564 = vsub.f32 0.0, %v548
    %v565 = vsub.f32 0.0, %v549
    %v566 = vsub.f32 0.0, %v550
    %v567 = vsub.f32 0.0, %v551
    %v568 = vsub.f32 0.0, %v552
    %v569 = vmul.f32 %v553, 1.442695
    %v570 = vpow.pop %v569
    %v571 = vmul.f32 %v554, 1.442695
    %v572 = vpow.pop %v571
    %v573 = vmul.f32 %v555, 1.442695
    %v574 = vpow.pop %v573
    %v575 = vmul.f32 %v556, 1.442695
    %v576 = vpow.pop %v575
    %v577 = vmul.f32 %v557, 1.442695
    %v578 = vpow.pop %v577
    %v579 = vmul.f32 %v558, 1.442695
    %v580 = vpow.pop %v579
    %v581 = vmul.f32 %v559, 1.442695
    %v582 = vpow.pop %v581
    %v583 = vmul.f32 %v560, 1.442695
    %v584 = vpow.pop %v583
    %v585 = vmul.f32 %v561, 1.442695
    %v586 = vpow.pop %v585
    %v587 = vmul.f32 %v562, 1.442695
    %v588 = vpow.pop %v587
    %v589 = vmul.f32 %v563, 1.442695
    %v590 = vpow.pop %v589
    %v591 = vmul.f32 %v564, 1.442695
    %v592 = vpow.pop %v591
    %v593 = vmul.f32 %v565, 1.442695
    %v594 = vpow.pop %v593
    %v595 = vmul.f32 %v566, 1.442695
    %v596 = vpow.pop %v595
    %v597 = vmul.f32 %v567, 1.442695
    %v598 = vpow.pop %v597
    %v599 = vmul.f32 %v568, 1.442695
    %v600 = vpow.pop %v599
    %v601 = vadd.f32 %v570, 1.0
    %v602 = vadd.f32 %v572, 1.0
    %v603 = vadd.f32 %v574, 1.0
    %v604 = vadd.f32 %v576, 1.0
    %v605 = vadd.f32 %v578, 1.0
    %v606 = vadd.f32 %v580, 1.0
    %v607 = vadd.f32 %v582, 1.0
    %v608 = vadd.f32 %v584, 1.0
    %v609 = vadd.f32 %v586, 1.0
    %v610 = vadd.f32 %v588, 1.0
    %v611 = vadd.f32 %v590, 1.0
    %v612 = vadd.f32 %v592, 1.0
    %v613 = vadd.f32 %v594, 1.0
    %v614 = vadd.f32 %v596, 1.0
    %v615 = vadd.f32 %v598, 1.0
    %v616 = vadd.f32 %v600, 1.0
    %v617 = vrcp.pop %v601
    %v618 = vrcp.pop %v602
    %v619 = vrcp.pop %v603
    %v620 = vrcp.pop %v604
    %v621 = vrcp.pop %v605
    %v622 = vrcp.pop %v606
    %v623 = vrcp.pop %v607
    %v624 = vrcp.pop %v608
    %v625 = vrcp.pop %v609
    %v626 = vrcp.pop %v610
    %v627 = vrcp.pop %v611
    %v628 = vrcp.pop %v612
    %v629 = vrcp.pop %v613
    %v630 = vrcp.pop %v614
    %v631 = vrcp.pop %v615
    %v632 = vrcp.pop %v616
    %v633 = vtanh.pop %v348
    %v634 = vtanh.pop %v352
    %v635 = vtanh.pop %v358
    %v636 = vtanh.pop %v362
    %v637 = vtanh.pop %v368
    %v638 = vtanh.pop %v372
    %v639 = vtanh.pop %v378
    %v640 = vtanh.pop %v382
    %v641 = vtanh.pop %v388
    %v642 = vtanh.pop %v392
    %v643 = vtanh.pop %v398
    %v644 = vtanh.pop %v402
    %v645 = vtanh.pop %v408
    %v646 = vtanh.pop %v412
    %v647 = vtanh.pop %v418
    %v648 = vtanh.pop %v422
    %v649 = vmax.f32 %v459, -30.0
    %v650 = vmax.f32 %v462, -30.0
    %v651 = vmax.f32 %v467, -30.0
    %v652 = vmax.f32 %v470, -30.0
    %v653 = vmax.f32 %v475, -30.0
    %v654 = vmax.f32 %v478, -30.0
    %v655 = vmax.f32 %v483, -30.0
    %v656 = vmax.f32 %v486, -30.0
    %v657 = vmax.f32 %v491, -30.0
    %v658 = vmax.f32 %v494, -30.0
    %v659 = vmax.f32 %v499, -30.0
    %v660 = vmax.f32 %v502, -30.0
    %v661 = vmax.f32 %v507, -30.0
    %v662 = vmax.f32 %v510, -30.0
    %v663 = vmax.f32 %v515, -30.0
    %v664 = vmax.f32 %v518, -30.0
    %v665 = vmin.f32 %v649, 30.0
    %v666 = vmin.f32 %v650, 30.0
    %v667 = vmin.f32 %v651, 30.0
    %v668 = vmin.f32 %v652, 30.0
    %v669 = vmin.f32 %v653, 30.0
    %v670 = vmin.f32 %v654, 30.0
    %v671 = vmin.f32 %v655, 30.0
    %v672 = vmin.f32 %v656, 30.0
    %v673 = vmin.f32 %v657, 30.0
    %v674 = vmin.f32 %v658, 30.0
    %v675 = vmin.f32 %v659, 30.0
    %v676 = vmin.f32 %v660, 30.0
    %v677 = vmin.f32 %v661, 30.0
    %v678 = vmin.f32 %v662, 30.0
    %v679 = vmin.f32 %v663, 30.0
    %v680 = vmin.f32 %v664, 30.0
    %v681 = vsub.f32 0.0, %v665
    %v682 = vsub.f32 0.0, %v666
    %v683 = vsub.f32 0.0, %v667
    %v684 = vsub.f32 0.0, %v668
    %v685 = vsub.f32 0.0, %v669
    %v686 = vsub.f32 0.0, %v670
    %v687 = vsub.f32 0.0, %v671
    %v688 = vsub.f32 0.0, %v672
    %v689 = vsub.f32 0.0, %v673
    %v690 = vsub.f32 0.0, %v674
    %v691 = vsub.f32 0.0, %v675
    %v692 = vsub.f32 0.0, %v676
    %v693 = vsub.f32 0.0, %v677
    %v694 = vsub.f32 0.0, %v678
    %v695 = vsub.f32 0.0, %v679
    %v696 = vsub.f32 0.0, %v680
    %v697 = vmul.f32 %v681, 1.442695
    %v698 = vpow.pop %v697
    %v699 = vmul.f32 %v682, 1.442695
    %v700 = vpow.pop %v699
    %v701 = vmul.f32 %v683, 1.442695
    %v702 = vpow.pop %v701
    %v703 = vmul.f32 %v684, 1.442695
    %v704 = vpow.pop %v703
    %v705 = vmul.f32 %v685, 1.442695
    %v706 = vpow.pop %v705
    %v707 = vmul.f32 %v686, 1.442695
    %v708 = vpow.pop %v707
    %v709 = vmul.f32 %v687, 1.442695
    %v710 = vpow.pop %v709
    %v711 = vmul.f32 %v688, 1.442695
    %v712 = vpow.pop %v711
    %v713 = vmul.f32 %v689, 1.442695
    %v714 = vpow.pop %v713
    %v715 = vmul.f32 %v690, 1.442695
    %v716 = vpow.pop %v715
    %v717 = vmul.f32 %v691, 1.442695
    %v718 = vpow.pop %v717
    %v719 = vmul.f32 %v692, 1.442695
    %v720 = vpow.pop %v719
    %v721 = vmul.f32 %v693, 1.442695
    %v722 = vpow.pop %v721
    %v723 = vmul.f32 %v694, 1.442695
    %v724 = vpow.pop %v723
    %v725 = vmul.f32 %v695, 1.442695
    %v726 = vpow.pop %v725
    %v727 = vmul.f32 %v696, 1.442695
    %v728 = vpow.pop %v727
    %v729 = vadd.f32 %v698, 1.0
    %v730 = vadd.f32 %v700, 1.0
    %v731 = vadd.f32 %v702, 1.0
    %v732 = vadd.f32 %v704, 1.0
    %v733 = vadd.f32 %v706, 1.0
    %v734 = vadd.f32 %v708, 1.0
    %v735 = vadd.f32 %v710, 1.0
    %v736 = vadd.f32 %v712, 1.0
    %v737 = vadd.f32 %v714, 1.0
    %v738 = vadd.f32 %v716, 1.0
    %v739 = vadd.f32 %v718, 1.0
    %v740 = vadd.f32 %v720, 1.0
    %v741 = vadd.f32 %v722, 1.0
    %v742 = vadd.f32 %v724, 1.0
    %v743 = vadd.f32 %v726, 1.0
    %v744 = vadd.f32 %v728, 1.0
    %v745 = vrcp.pop %v729
    %v746 = vrcp.pop %v730
    %v747 = vrcp.pop %v731
    %v748 = vrcp.pop %v732
    %v749 = vrcp.pop %v733
    %v750 = vrcp.pop %v734
    %v751 = vrcp.pop %v735
    %v752 = vrcp.pop %v736
    %v753 = vrcp.pop %v737
    %v754 = vrcp.pop %v738
    %v755 = vrcp.pop %v739
    %v756 = vrcp.pop %v740
    %v757 = vrcp.pop %v741
    %v758 = vrcp.pop %v742
    %v759 = vrcp.pop %v743
    %v760 = vrcp.pop %v744
    %v761 = vmul.f32 %v617, %v633
    %v762 = vmul.f32 %v618, %v634
    %v763 = vmul.f32 %v619, %v635
    %v764 = vmul.f32 %v620, %v636
    %v765 = vmul.f32 %v621, %v637
    %v766 = vmul.f32 %v622, %v638
    %v767 = vmul.f32 %v623, %v639
    %v768 = vmul.f32 %v624, %v640
    %v769 = vmul.f32 %v625, %v641
    %v770 = vmul.f32 %v626, %v642
    %v771 = vmul.f32 %v627, %v643
    %v772 = vmul.f32 %v628, %v644
    %v773 = vmul.f32 %v629, %v645
    %v774 = vmul.f32 %v630, %v646
    %v775 = vmul.f32 %v631, %v647
    %v776 = vmul.f32 %v632, %v648
    %v777 = vtanh.pop %v761
    %v778 = vtanh.pop %v762
    %v779 = vtanh.pop %v763
    %v780 = vtanh.pop %v764
    %v781 = vtanh.pop %v765
    %v782 = vtanh.pop %v766
    %v783 = vtanh.pop %v767
    %v784 = vtanh.pop %v768
    %v785 = vtanh.pop %v769
    %v786 = vtanh.pop %v770
    %v787 = vtanh.pop %v771
    %v788 = vtanh.pop %v772
    %v789 = vtanh.pop %v773
    %v790 = vtanh.pop %v774
    %v791 = vtanh.pop %v775
    %v792 = vtanh.pop %v776
    %v793 = vmul.f32 %v745, %v777
    %v794 = vmul.f32 %v746, %v778
    %v795 = vmul.f32 %v747, %v779
    %v796 = vmul.f32 %v748, %v780
    %v797 = vmul.f32 %v749, %v781
    %v798 = vmul.f32 %v750, %v782
    %v799 = vmul.f32 %v751, %v783
    %v800 = vmul.f32 %v752, %v784
    %v801 = vmul.f32 %v753, %v785
    %v802 = vmul.f32 %v754, %v786
    %v803 = vmul.f32 %v755, %v787
    %v804 = vmul.f32 %v756, %v788
    %v805 = vmul.f32 %v757, %v789
    %v806 = vmul.f32 %v758, %v790
    %v807 = vmul.f32 %v759, %v791
    %v808 = vmul.f32 %v760, %v792
    %v809 = vpack.c.bf16 %v794, %v793
    %v810 = vpack.c.bf16 %v796, %v795
    %v811 = vpack.c.bf16 %v798, %v797
    %v812 = vpack.c.bf16 %v800, %v799
    %v813 = vpack.c.bf16 %v802, %v801
    %v814 = vpack.c.bf16 %v804, %v803
    %v815 = vpack.c.bf16 %v806, %v805
    %v816 = vpack.c.bf16 %v808, %v807
    %v817 = vld [vmem:[#allocation8] sm:$0xf]
    %v818 = vld [vmem:[#allocation8 + $0x4] sm:$0xf]
    %v819 = vld [vmem:[#allocation8 + $0x8] sm:$0xf]
    %v820 = vld [vmem:[#allocation8 + $0xc] sm:$0xf]
    %v821 = vld [vmem:[#allocation8 + $0x10] sm:$0xf]
    %v822 = vld [vmem:[#allocation8 + $0x14] sm:$0xf]
    %v823 = vld [vmem:[#allocation8 + $0x18] sm:$0xf]
    %v824 = vld [vmem:[#allocation8 + $0x1c] sm:$0xf]
    %v825 = vld [vmem:[#allocation8 + $0x20] sm:$0xf]
    %v826 = vld [vmem:[#allocation8 + $0x24] sm:$0xf]
    %v827 = vld [vmem:[#allocation8 + $0x28] sm:$0xf]
    %v828 = vld [vmem:[#allocation8 + $0x2c] sm:$0xf]
    %v829 = vld [vmem:[#allocation8 + $0x30] sm:$0xf]
    %v830 = vld [vmem:[#allocation8 + $0x34] sm:$0xf]
    %v831 = vld [vmem:[#allocation8 + $0x38] sm:$0xf]
    %v832 = vld [vmem:[#allocation8 + $0x3c] sm:$0xf]
    %v833 = vld [vmem:[%s4] sm:$0x1]
    %v835 = vlaneseq
    %v836 = vshrl.u32 %v835, 7
    %v837 = vsub.s32 0, %v836
    %v838 = vrot.slane %v833, %v837
    %v856 = vunpack.c.l.b16 %v817
    %v857 = vunpack.c.l.b16 %v818
    %v858 = vunpack.c.l.b16 %v819
    %v859 = vunpack.c.l.b16 %v820
    %v860 = vunpack.c.l.b16 %v821
    %v861 = vunpack.c.l.b16 %v822
    %v862 = vunpack.c.l.b16 %v823
    %v863 = vunpack.c.l.b16 %v824
    %v864 = vunpack.c.l.b16 %v825
    %v865 = vunpack.c.l.b16 %v826
    %v866 = vunpack.c.l.b16 %v827
    %v867 = vunpack.c.l.b16 %v828
    %v868 = vunpack.c.l.b16 %v829
    %v869 = vunpack.c.l.b16 %v830
    %v870 = vunpack.c.l.b16 %v831
    %v871 = vunpack.c.l.b16 %v832
    %v872 = vpack.c.b16 %v857, %v856
    %v873 = vpack.c.b16 %v859, %v858
    %v874 = vpack.c.b16 %v861, %v860
    %v875 = vpack.c.b16 %v863, %v862
    %v876 = vpack.c.b16 %v865, %v864
    %v877 = vpack.c.b16 %v867, %v866
    %v878 = vpack.c.b16 %v869, %v868
    %v879 = vpack.c.b16 %v871, %v870
    %888 = vmatprep.subr.bf16.mxu0 0
    %889 = vmatpush1.bf16.msra.mxu0 %v872
    %890 = vmatprep.subr.bf16.mxu0 0
    %891 = vmatpush1.bf16.msra.mxu0 %v873
    %892 = vmatprep.subr.bf16.mxu0 0
    %893 = vmatpush1.bf16.msra.mxu0 %v874
    %894 = vmatprep.subr.bf16.mxu0 0
    %895 = vmatpush1.bf16.msra.mxu0 %v875
    %896 = vmatprep.subr.bf16.mxu0 0
    %897 = vmatpush1.bf16.msra.mxu0 %v876
    %898 = vmatprep.subr.bf16.mxu0 0
    %899 = vmatpush1.bf16.msra.mxu0 %v877
    %900 = vmatprep.subr.bf16.mxu0 0
    %901 = vmatpush1.bf16.msra.mxu0 %v878
    %902 = vmatprep.subr.bf16.mxu0 0
    %903 = vmatpush1.bf16.msra.mxu0 %v879
    %904 = vmatprep.subr.bf16.mxu0 0
    %905 = vmatpush1.bf16.msra.mxu0 0
    %906 = vmatprep.subr.bf16.mxu0 0
    %907 = vmatpush1.bf16.msra.mxu0 0
    %908 = vmatprep.subr.bf16.mxu0 0
    %909 = vmatpush1.bf16.msra.mxu0 0
    %910 = vmatprep.subr.bf16.mxu0 0
    %911 = vmatpush1.bf16.msra.mxu0 0
    %912 = vmatprep.subr.bf16.mxu0 0
    %913 = vmatpush1.bf16.msra.mxu0 0
    %914 = vmatprep.subr.bf16.mxu0 0
    %915 = vmatpush1.bf16.msra.mxu0 0
    %916 = vmatprep.subr.bf16.mxu0 0
    %917 = vmatpush1.bf16.msra.mxu0 0
    %918 = vmatprep.subr.bf16.mxu0 0
    %919 = vmatpush1.bf16.msra.mxu0 0
    %920 = vmatprep.mubr.bf16.mxu0 0
    %921 = vmatmul.mubr.bf16.gmra.mrb[0].mxu0 %v809
    %v922 = vpop.f32.mrb[0].mxu0
    %v923 = vadd.f32 %v838, %v922
    %v924 = vpop.f32.mrb[0].mxu0
    %v925 = vpop.f32.mrb[0].mxu0
    %v926 = vadd.f32 %v838, %v925
    %v927 = vpop.f32.mrb[0].mxu0
    %928 = vmatprep.mubr.bf16.mxu0 0
    %929 = vmatmul.mubr.bf16.gmra.mrb[0].mxu0 %v810
    %v930 = vpop.f32.mrb[0].mxu0
    %v931 = vadd.f32 %v838, %v930
    %v932 = vpop.f32.mrb[0].mxu0
    %v933 = vpop.f32.mrb[0].mxu0
    %v934 = vadd.f32 %v838, %v933
    %v935 = vpop.f32.mrb[0].mxu0
    %936 = vmatprep.mubr.bf16.mxu0 0
    %937 = vmatmul.mubr.bf16.gmra.mrb[0].mxu0 %v811
    %v938 = vpop.f32.mrb[0].mxu0
    %v939 = vadd.f32 %v838, %v938
    %v940 = vpop.f32.mrb[0].mxu0
    %v941 = vpop.f32.mrb[0].mxu0
    %v942 = vadd.f32 %v838, %v941
    %v943 = vpop.f32.mrb[0].mxu0
    %944 = vmatprep.mubr.bf16.mxu0 0
    %945 = vmatmul.mubr.bf16.gmra.mrb[0].mxu0 %v812
    %v946 = vpop.f32.mrb[0].mxu0
    %v947 = vadd.f32 %v838, %v946
    %v948 = vpop.f32.mrb[0].mxu0
    %v949 = vpop.f32.mrb[0].mxu0
    %v950 = vadd.f32 %v838, %v949
    %v951 = vpop.f32.mrb[0].mxu0
    %952 = vmatprep.mubr.bf16.mxu0 0
    %953 = vmatmul.mubr.bf16.gmra.mrb[0].mxu0 %v813
    %v954 = vpop.f32.mrb[0].mxu0
    %v955 = vadd.f32 %v838, %v954
    %v956 = vpop.f32.mrb[0].mxu0
    %v957 = vpop.f32.mrb[0].mxu0
    %v958 = vadd.f32 %v838, %v957
    %v959 = vpop.f32.mrb[0].mxu0
    %960 = vmatprep.mubr.bf16.mxu0 0
    %961 = vmatmul.mubr.bf16.gmra.mrb[0].mxu0 %v814
    %v962 = vpop.f32.mrb[0].mxu0
    %v963 = vadd.f32 %v838, %v962
    %v964 = vpop.f32.mrb[0].mxu0
    %v965 = vpop.f32.mrb[0].mxu0
    %v966 = vadd.f32 %v838, %v965
    %v967 = vpop.f32.mrb[0].mxu0
    %968 = vmatprep.mubr.bf16.mxu0 0
    %969 = vmatmul.mubr.bf16.gmra.mrb[0].mxu0 %v815
    %v970 = vpop.f32.mrb[0].mxu0
    %v971 = vadd.f32 %v838, %v970
    %v972 = vpop.f32.mrb[0].mxu0
    %v973 = vpop.f32.mrb[0].mxu0
    %v974 = vadd.f32 %v838, %v973
    %v975 = vpop.f32.mrb[0].mxu0
    %976 = vmatprep.mubr.bf16.mxu0 0
    %977 = vmatmul.mubr.bf16.gmra.mrb[0].mxu0 %v816
    %v978 = vpop.f32.mrb[0].mxu0
    %v979 = vadd.f32 %v838, %v978
    %v980 = vpop.f32.mrb[0].mxu0
    %v981 = vpop.f32.mrb[0].mxu0
    %v982 = vadd.f32 %v838, %v981
    %v983 = vpop.f32.mrb[0].mxu0
    %984 = vdwg.mxu0
    %v985 = vmax.f32 %v923, -30.0
    %v986 = vmax.f32 %v926, -30.0
    %v987 = vmax.f32 %v931, -30.0
    %v988 = vmax.f32 %v934, -30.0
    %v989 = vmax.f32 %v939, -30.0
    %v990 = vmax.f32 %v942, -30.0
    %v991 = vmax.f32 %v947, -30.0
    %v992 = vmax.f32 %v950, -30.0
    %v993 = vmax.f32 %v955, -30.0
    %v994 = vmax.f32 %v958, -30.0
    %v995 = vmax.f32 %v963, -30.0
    %v996 = vmax.f32 %v966, -30.0
    %v997 = vmax.f32 %v971, -30.0
    %v998 = vmax.f32 %v974, -30.0
    %v999 = vmax.f32 %v979, -30.0
    %v1000 = vmax.f32 %v982, -30.0
    %v1001 = vmin.f32 %v985, 30.0
    %v1002 = vmin.f32 %v986, 30.0
    %v1003 = vmin.f32 %v987, 30.0
    %v1004 = vmin.f32 %v988, 30.0
    %v1005 = vmin.f32 %v989, 30.0
    %v1006 = vmin.f32 %v990, 30.0
    %v1007 = vmin.f32 %v991, 30.0
    %v1008 = vmin.f32 %v992, 30.0
    %v1009 = vmin.f32 %v993, 30.0
    %v1010 = vmin.f32 %v994, 30.0
    %v1011 = vmin.f32 %v995, 30.0
    %v1012 = vmin.f32 %v996, 30.0
    %v1013 = vmin.f32 %v997, 30.0
    %v1014 = vmin.f32 %v998, 30.0
    %v1015 = vmin.f32 %v999, 30.0
    %v1016 = vmin.f32 %v1000, 30.0
    %v1017 = vsub.f32 0.0, %v1001
    %v1018 = vsub.f32 0.0, %v1002
    %v1019 = vsub.f32 0.0, %v1003
    %v1020 = vsub.f32 0.0, %v1004
    %v1021 = vsub.f32 0.0, %v1005
    %v1022 = vsub.f32 0.0, %v1006
    %v1023 = vsub.f32 0.0, %v1007
    %v1024 = vsub.f32 0.0, %v1008
    %v1025 = vsub.f32 0.0, %v1009
    %v1026 = vsub.f32 0.0, %v1010
    %v1027 = vsub.f32 0.0, %v1011
    %v1028 = vsub.f32 0.0, %v1012
    %v1029 = vsub.f32 0.0, %v1013
    %v1030 = vsub.f32 0.0, %v1014
    %v1031 = vsub.f32 0.0, %v1015
    %v1032 = vsub.f32 0.0, %v1016
    %v1033 = vmul.f32 %v1017, 1.442695
    %v1034 = vpow.pop %v1033
    %v1035 = vmul.f32 %v1018, 1.442695
    %v1036 = vpow.pop %v1035
    %v1037 = vmul.f32 %v1019, 1.442695
    %v1038 = vpow.pop %v1037
    %v1039 = vmul.f32 %v1020, 1.442695
    %v1040 = vpow.pop %v1039
    %v1041 = vmul.f32 %v1021, 1.442695
    %v1042 = vpow.pop %v1041
    %v1043 = vmul.f32 %v1022, 1.442695
    %v1044 = vpow.pop %v1043
    %v1045 = vmul.f32 %v1023, 1.442695
    %v1046 = vpow.pop %v1045
    %v1047 = vmul.f32 %v1024, 1.442695
    %v1048 = vpow.pop %v1047
    %v1049 = vmul.f32 %v1025, 1.442695
    %v1050 = vpow.pop %v1049
    %v1051 = vmul.f32 %v1026, 1.442695
    %v1052 = vpow.pop %v1051
    %v1053 = vmul.f32 %v1027, 1.442695
    %v1054 = vpow.pop %v1053
    %v1055 = vmul.f32 %v1028, 1.442695
    %v1056 = vpow.pop %v1055
    %v1057 = vmul.f32 %v1029, 1.442695
    %v1058 = vpow.pop %v1057
    %v1059 = vmul.f32 %v1030, 1.442695
    %v1060 = vpow.pop %v1059
    %v1061 = vmul.f32 %v1031, 1.442695
    %v1062 = vpow.pop %v1061
    %v1063 = vmul.f32 %v1032, 1.442695
    %v1064 = vpow.pop %v1063
    %v1065 = vadd.f32 %v1034, 1.0
    %v1066 = vadd.f32 %v1036, 1.0
    %v1067 = vadd.f32 %v1038, 1.0
    %v1068 = vadd.f32 %v1040, 1.0
    %v1069 = vadd.f32 %v1042, 1.0
    %v1070 = vadd.f32 %v1044, 1.0
    %v1071 = vadd.f32 %v1046, 1.0
    %v1072 = vadd.f32 %v1048, 1.0
    %v1073 = vadd.f32 %v1050, 1.0
    %v1074 = vadd.f32 %v1052, 1.0
    %v1075 = vadd.f32 %v1054, 1.0
    %v1076 = vadd.f32 %v1056, 1.0
    %v1077 = vadd.f32 %v1058, 1.0
    %v1078 = vadd.f32 %v1060, 1.0
    %v1079 = vadd.f32 %v1062, 1.0
    %v1080 = vadd.f32 %v1064, 1.0
    %v1081 = vrcp.pop %v1065
    %v1082 = vrcp.pop %v1066
    %v1083 = vrcp.pop %v1067
    %v1084 = vrcp.pop %v1068
    %v1085 = vrcp.pop %v1069
    %v1086 = vrcp.pop %v1070
    %v1087 = vrcp.pop %v1071
    %v1088 = vrcp.pop %v1072
    %v1089 = vrcp.pop %v1073
    %v1090 = vrcp.pop %v1074
    %v1091 = vrcp.pop %v1075
    %v1092 = vrcp.pop %v1076
    %v1093 = vrcp.pop %v1077
    %v1094 = vrcp.pop %v1078
    %v1095 = vrcp.pop %v1079
    %v1096 = vrcp.pop %v1080
    %v1097 = vld [vmem:[%s5] sm:$0xf]
    %v1098 = vpack.c.bf16 %v1082, %v1081
    %v1099 = vpack.c.bf16 %v1084, %v1083
    %v1100 = vpack.c.bf16 %v1086, %v1085
    %v1101 = vpack.c.bf16 %v1088, %v1087
    %v1102 = vpack.c.bf16 %v1090, %v1089
    %v1103 = vpack.c.bf16 %v1092, %v1091
    %v1104 = vpack.c.bf16 %v1094, %v1093
    %v1105 = vpack.c.bf16 %v1096, %v1095
    %1106 = vmatprep.subr.bf16.mxu0 0
    %1107 = vmatpush1.bf16.xpose.msra.mxu0 %v1098
    %1108 = vmatprep.subr.bf16.mxu0 0
    %1109 = vmatpush1.bf16.xpose.msra.mxu0 %v1099
    %1110 = vmatprep.subr.bf16.mxu0 0
    %1111 = vmatpush1.bf16.xpose.msra.mxu0 %v1100
    %1112 = vmatprep.subr.bf16.mxu0 0
    %1113 = vmatpush1.bf16.xpose.msra.mxu0 %v1101
    %1114 = vmatprep.subr.bf16.mxu0 0
    %1115 = vmatpush1.bf16.xpose.msra.mxu0 %v1102
    %1116 = vmatprep.subr.bf16.mxu0 0
    %1117 = vmatpush1.bf16.xpose.msra.mxu0 %v1103
    %1118 = vmatprep.subr.bf16.mxu0 0
    %1119 = vmatpush1.bf16.xpose.msra.mxu0 %v1104
    %1120 = vmatprep.subr.bf16.mxu0 0
    %1121 = vmatpush1.bf16.xpose.msra.mxu0 %v1105
    %1122 = vmatprep.subr.bf16.mxu0 0
    %1123 = vmatpush1.bf16.xpose.msra.mxu0 0
    %1124 = vmatprep.subr.bf16.mxu0 0
    %1125 = vmatpush1.bf16.xpose.msra.mxu0 0
    %1126 = vmatprep.subr.bf16.mxu0 0
    %1127 = vmatpush1.bf16.xpose.msra.mxu0 0
    %1128 = vmatprep.subr.bf16.mxu0 0
    %1129 = vmatpush1.bf16.xpose.msra.mxu0 0
    %1130 = vmatprep.subr.bf16.mxu0 0
    %1131 = vmatpush1.bf16.xpose.msra.mxu0 0
    %1132 = vmatprep.subr.bf16.mxu0 0
    %1133 = vmatpush1.bf16.xpose.msra.mxu0 0
    %1134 = vmatprep.subr.bf16.mxu0 0
    %1135 = vmatpush1.bf16.xpose.msra.mxu0 0
    %1136 = vmatprep.subr.bf16.mxu0 0
    %1137 = vmatpush1.bf16.xpose.msra.mxu0 0
    %1138 = vmatprep.mubr.bf16.mxu0 0
    %1139 = vmatmul.mubr.bf16.gmra.mrb[0].mxu0 %v1097
    %v1140 = vpop.f32.mrb[0].mxu0
    %v1141 = vadd.f32 0.0, %v1140
    %v1142 = vpop.f32.mrb[0].mxu0
    %v1143 = vpop.f32.mrb[0].mxu0
    %v1144 = vpop.f32.mrb[0].mxu0
    %1145 = vdwg.mxu0
    %s1146 = sld [smem:[#allocation2]]
    %v1147 = vstv %s1146
    %v1148 = vadd.f32 %v1141, %v1147
    %v1149 = vmax.f32 %v1148, -30.0
    %v1150 = vmin.f32 %v1149, 30.0
    %v1151 = vsub.f32 0.0, %v1150
    %v1152 = vmul.f32 %v1151, 1.442695
    %v1153 = vpow.pop %v1152
    %v1154 = vadd.f32 %v1153, 1.0
    %v1155 = vrcp.pop %v1154
    %v1156 = vmul.f32 1.0, %v1155
    %1157 = vst [vmem:[#allocation9] sm:$0x1] %v1156
    // Predicated region
    $region42: #{tpu_custom_call.1} parent=1 // pred_check
      _
    $region43: #{tpu_custom_call.1} parent=1 // pred_check_branch
      %1159 = sbr.rel (0) target = $region45
    $region44: #{tpu_custom_call.1} parent=1 // pred_region
      %s1161 = ssub.s32 16, 16
      %1162 = vsyncadd [#allocation5], %s1161
      %s1164 = sshll.u32 [#allocation9], 4
      %s1165 = int_to_ptr.vmem [resolvable:$true] %s1164
      %1167 = dma.vmem_to_hbm [thread:$0]  %s1165, 16, %s7, [#allocation5]
    $region45: #{tpu_custom_call.1} parent=1 // pred_fallthru
      _
    // Predicated region
    $region46: #{tpu_custom_call.1} parent=1 // pred_check
      _
    $region47: #{tpu_custom_call.1} parent=1 // pred_check_branch
      %1169 = sbr.rel (0) target = $region49
    $region48: #{tpu_custom_call.1} parent=1 // pred_region
      %1170 = dma.done [#allocation5], 16
    $region49: #{tpu_custom_call.1} parent=1 // pred_fallthru
      _
    %1171 = vsyncpa [#allocation4], 1
    %1172 = vsyncpa [#allocation7], 1
    %1173 = vsyncpa [#allocation5], 1

</llo_original>
